<compile_context>
chip_gen: v7x
topology: tpu7x:2x2x1
jax: 0.10.0
libtpu: 0.0.40
codegen_flags: <defaults>
</compile_context>

<pallas_src>
import functools
import math

import jax
import jax.numpy as jnp
from jax import lax
from jax.experimental import pallas as pl
from jax.experimental.pallas import tpu as pltpu


def _round_up(x, m):
    return ((x + m - 1) // m) * m


def _vmem_limit_bytes(block_bytes, scratch_bytes=0):
    """Double-buffered pipeline blocks + persistent scratch + headroom,
    clamped to ~60% of physical VMEM (generation-aware: ~38 MiB on v7x,
    ~76 MiB on v5e/v6e)."""
    try:
        cap = int(pltpu.get_tpu_info().vmem_capacity_bytes)
    except Exception:
        cap = 64 << 20  # assume v7x (smallest) if the query is unavailable
    need = 2 * block_bytes + scratch_bytes + (4 << 20)
    return int(min(max(need, 16 << 20), (cap * 3) // 5))


# --------------------------------------------------------------------------
# Pass 1: hoisted Q/K/V linear projections (once per token).
# --------------------------------------------------------------------------
def _project_kernel(xq_ref, xk_ref, xv_ref,
                    wq_ref, bq_ref, wk_ref, bk_ref, wv_ref, bv_ref,
                    q_out, k_out, v_out, *, scale, compute_dtype):
    """Grid = (batch, seq_tile).

    x*_ref : (1, Ts, dim_in) caller dtype (cast here -> activations are read
             from HBM exactly once, no padded copy in the wrapper).
    w*_ref : (dim_in, dk_p) compute_dtype.   b*_ref : (1, dk_p) f32.
    *_out  : (1, Ts, dk_p) compute_dtype.  1/sqrt(dim_k) folded into Q.
    """
    xq = xq_ref[0].astype(compute_dtype)
    xk = xk_ref[0].astype(compute_dtype)
    xv = xv_ref[0].astype(compute_dtype)
    q = jnp.dot(xq, wq_ref[...], preferred_element_type=jnp.float32) + bq_ref[...]
    k = jnp.dot(xk, wk_ref[...], preferred_element_type=jnp.float32) + bk_ref[...]
    v = jnp.dot(xv, wv_ref[...], preferred_element_type=jnp.float32) + bv_ref[...]
    q_out[0] = (q * scale).astype(q_out.dtype)
    k_out[0] = k.astype(k_out.dtype)
    v_out[0] = v.astype(v_out.dtype)


# --------------------------------------------------------------------------
# Pass 2: flash attention (online softmax) over the projected tensors.
# --------------------------------------------------------------------------
def _flash_kernel(q_ref, k_ref, v_ref, out_ref, m_ref, l_ref, acc_ref,
                  *, tile_kv, seq_true, seq_padded, approx_recip):
    """Grid = (batch, q_tile, kv_tile); kv_tile is the innermost reduction.

    q_ref : (1, Tq, dk_p) compute dtype, pre-scaled by 1/sqrt(dim_k).
    k/v   : (1, Tkv, dk_p) compute dtype.
    out   : (1, Tq, dk_p).   scratch: m/l (Tq, 1) f32, acc (Tq, dk_p) f32.
    """
    kv = pl.program_id(2)

    @pl.when(kv == 0)
    def _init():
        m_ref[...] = jnp.full(m_ref.shape, -1e30, m_ref.dtype)
        l_ref[...] = jnp.zeros(l_ref.shape, l_ref.dtype)
        acc_ref[...] = jnp.zeros(acc_ref.shape, acc_ref.dtype)

    q = q_ref[0]
    k = k_ref[0]
    v = v_ref[0]

    # scores = q @ k^T without an XLU transpose: contract feature dims directly.
    scores = lax.dot_general(q, k, dimension_numbers=(((1,), (1,)), ((), ())),
                             preferred_element_type=jnp.float32)

    if seq_padded != seq_true:  # static: masking only emitted when seq was padded
        col = lax.broadcasted_iota(jnp.int32, scores.shape, 1)
        scores = jnp.where(kv * tile_kv + col < seq_true, scores, -1e30)

    # Online (flash) softmax update, all in f32.
    m_prev = m_ref[...]
    m_new = jnp.maximum(m_prev, jnp.max(scores, axis=-1, keepdims=True))
    alpha = jnp.exp(m_prev - m_new)
    p = jnp.exp(scores - m_new)
    l_ref[...] = alpha * l_ref[...] + jnp.sum(p, axis=-1, keepdims=True)
    acc_ref[...] = alpha * acc_ref[...] + jnp.dot(
        p.astype(v.dtype), v, preferred_element_type=jnp.float32)
    m_ref[...] = m_new

    @pl.when(kv == pl.num_programs(2) - 1)
    def _finalize():
        inv = pl.reciprocal(l_ref[...], approx=approx_recip)
        out_ref[0] = (acc_ref[...] * inv).astype(out_ref.dtype)


# --------------------------------------------------------------------------
# Wrapper
# --------------------------------------------------------------------------
def attention_head(query, key, value, params, *, compute_dtype=jnp.bfloat16,
                   tile_q_max=256, tile_kv_max=512):
    """query/key/value: (B, S, dim_in). Returns (B, S, dim_k) in query.dtype."""
    B, S, dim_in = query.shape
    dim_k = params["wq"].shape[1]
    out_dtype = query.dtype
    scale = 1.0 / math.sqrt(dim_k)

    # Lane-dense projected feature width (multiple of 128).
    dk_p = _round_up(dim_k, 128)

    # Sequence tiling: tile_q rounded to 16 (bf16 sublane packing); tile_kv is
    # the largest multiple of tile_q (<= tile_kv_max) dividing the padded seq,
    # which reduces online-softmax recurrence steps vs tile_kv == tile_q.
    tile_q = min(tile_q_max, _round_up(S, 16))
    s_p = _round_up(S, tile_q)
    n_q = s_p // tile_q
    kv_units = 1
    for d in range(1, n_q + 1):
        if n_q % d == 0 and d * tile_q <= max(tile_kv_max, tile_q):
            kv_units = d
    tile_kv = kv_units * tile_q
    n_kv = s_p // tile_kv

    # Pad only the sequence dim when needed; no dtype conversion and no feature
    # padding of activations (the projection kernel casts on the fly).
    def pad_seq(x):
        return x if s_p == S else jnp.pad(x, ((0, 0), (0, s_p - S), (0, 0)))

    def pad_w(w):
        w = w if dk_p == dim_k else jnp.pad(w, ((0, 0), (0, dk_p - dim_k)))
        return w.astype(compute_dtype)

    def pad_b(b):
        b = b if dk_p == dim_k else jnp.pad(b, ((0, 0), (0, dk_p - dim_k)))
        return b.astype(jnp.float32)

    q_in, k_in, v_in = pad_seq(query), pad_seq(key), pad_seq(value)
    wq, wk, wv = pad_w(params["wq"]), pad_w(params["wk"]), pad_w(params["wv"])
    bq, bk, bv = pad_b(params["bq"]), pad_b(params["bk"]), pad_b(params["bv"])

    act_bytes = jnp.dtype(query.dtype).itemsize
    c_bytes = jnp.dtype(compute_dtype).itemsize
    out_bytes = jnp.dtype(out_dtype).itemsize

    # ---------------- Pass 1: hoisted projections ----------------
    x_spec = pl.BlockSpec((1, tile_q, dim_in), lambda b, s: (b, s, 0))
    w_spec = pl.BlockSpec((dim_in, dk_p), lambda b, s: (0, 0))
    bias_spec = pl.BlockSpec((1, dk_p), lambda b, s: (0, 0))
    p_spec = pl.BlockSpec((1, tile_q, dk_p), lambda b, s: (b, s, 0))

    proj_block_bytes = (3 * tile_q * dim_in * act_bytes      # xq/xk/xv tiles
                        + 3 * dim_in * dk_p * c_bytes        # weights
                        + 3 * dk_p * 4                       # biases
                        + 3 * tile_q * dk_p * c_bytes)       # projected outputs
    proj_cost = pl.CostEstimate(
        flops=int(3 * 2 * B * s_p * dim_in * dk_p),
        transcendentals=0,
        bytes_accessed=int(3 * B * s_p * dim_in * act_bytes
                           + 3 * dim_in * dk_p * c_bytes + 3 * dk_p * 4
                           + 3 * B * s_p * dk_p * c_bytes))

    qp, kp, vp = pl.pallas_call(
        functools.partial(_project_kernel, scale=scale,
                          compute_dtype=compute_dtype),
        out_shape=tuple(jax.ShapeDtypeStruct((B, s_p, dk_p), compute_dtype)
                        for _ in range(3)),
        grid_spec=pltpu.PrefetchScalarGridSpec(
            num_scalar_prefetch=0,
            grid=(B, n_q),
            in_specs=[x_spec, x_spec, x_spec,
                      w_spec, bias_spec, w_spec, bias_spec, w_spec, bias_spec],
            out_specs=[p_spec, p_spec, p_spec]),
        compiler_params=pltpu.CompilerParams(
            dimension_semantics=("parallel", "parallel"),
            vmem_limit_bytes=_vmem_limit_bytes(proj_block_bytes)),
        cost_estimate=proj_cost,
    )(q_in, k_in, v_in, wq, bq, wk, bk, wv, bv)

    # ---------------- Pass 2: flash attention ----------------
    q_spec = pl.BlockSpec((1, tile_q, dk_p), lambda b, qi, ki: (b, qi, 0))
    kv_spec = pl.BlockSpec((1, tile_kv, dk_p), lambda b, qi, ki: (b, ki, 0))
    out_spec = pl.BlockSpec((1, tile_q, dk_p), lambda b, qi, ki: (b, qi, 0))

    flash_block_bytes = (tile_q * dk_p * c_bytes
                         + 2 * tile_kv * dk_p * c_bytes
                         + tile_q * dk_p * out_bytes)
    flash_scratch_bytes = (2 * tile_q * dk_p + 2 * tile_q) * 4
    flash_cost = pl.CostEstimate(
        flops=int(4 * B * s_p * s_p * dk_p),
        transcendentals=int(B * s_p * s_p),
        bytes_accessed=int(B * s_p * dk_p * c_bytes              # q (reused over kv)
                           + 2 * B * n_q * s_p * dk_p * c_bytes  # k, v per q-tile
                           + B * s_p * dk_p * out_bytes))        # output

    kernel = functools.partial(
        _flash_kernel, tile_kv=tile_kv, seq_true=S, seq_padded=s_p,
        approx_recip=(compute_dtype != jnp.float32))

    out_padded = pl.pallas_call(
        kernel,
        out_shape=jax.ShapeDtypeStruct((B, s_p, dk_p), out_dtype),
        grid_spec=pltpu.PrefetchScalarGridSpec(
            num_scalar_prefetch=0,
            grid=(B, n_q, n_kv),
            in_specs=[q_spec, kv_spec, kv_spec],
            out_specs=out_spec,
            scratch_shapes=[
                pltpu.VMEM((tile_q, 1), jnp.float32),     # running max  m
                pltpu.VMEM((tile_q, 1), jnp.float32),     # running sum  l
                pltpu.VMEM((tile_q, dk_p), jnp.float32),  # output accumulator
            ]),
        compiler_params=pltpu.CompilerParams(
            dimension_semantics=("parallel", "parallel", "arbitrary"),
            vmem_limit_bytes=_vmem_limit_bytes(flash_block_bytes,
                                               flash_scratch_bytes)),
        cost_estimate=flash_cost,
    )(qp, kp, vp)

    return out_padded[:, :S, :dim_k]


def init_params(key, dim_in, dim_k):
    """Deterministic nn.Linear-style init (uniform ±1/sqrt(dim_in))."""
    ks = jax.random.split(key, 6)
    bound = 1.0 / math.sqrt(dim_in)
    u = lambda k, shape: jax.random.uniform(k, shape, jnp.float32, -bound, bound)
    return {
        "wq": u(ks[0], (dim_in, dim_k)), "bq": u(ks[1], (1, dim_k)),
        "wk": u(ks[2], (dim_in, dim_k)), "bk": u(ks[3], (1, dim_k)),
        "wv": u(ks[4], (dim_in, dim_k)), "bv": u(ks[5], (1, dim_k)),
    }


def _reference(query, key, value, p):
    """Pure-JAX f32 reference matching the PyTorch forward."""
    q = query @ p["wq"] + p["bq"][0]
    k = key @ p["wk"] + p["bk"][0]
    v = value @ p["wv"] + p["bv"][0]
    scores = jnp.einsum("bqd,bkd->bqk", q, k) / math.sqrt(q.shape[-1])
    attn = jax.nn.softmax(scores, axis=-1)
    return jnp.einsum("bqk,bkd->bqd", attn, v)


def _check(name, out, ref, atol, rtol):
    assert out.shape == ref.shape, (name, out.shape, ref.shape)
    assert jnp.allclose(out, ref, atol=atol, rtol=rtol), f"{name}: mismatch vs reference"


if __name__ == "__main__":
    root = jax.random.PRNGKey(0)

    # Case 0: module-sized small shapes (single tile; padded/masked S=8 -> 16).
    # Case 1: forces multi q-tile and multi kv-tile online softmax with
    #         decoupled tile_q != tile_kv and a padded (masked) sequence tail.
    cases = [
        dict(B=2, S=8, dim_in=32, dim_k=16, tile_q_max=256, tile_kv_max=512),
        dict(B=2, S=60, dim_in=32, dim_k=16, tile_q_max=16, tile_kv_max=32),
    ]

    for idx, c in enumerate(cases):
        root, k_data, k_param = jax.random.split(root, 3)
        kq, kk, kv = jax.random.split(k_data, 3)
        query = jax.random.normal(kq, (c["B"], c["S"], c["dim_in"]), jnp.float32)
        key = jax.random.normal(kk, (c["B"], c["S"], c["dim_in"]), jnp.float32)
        value = jax.random.normal(kv, (c["B"], c["S"], c["dim_in"]), jnp.float32)
        params = init_params(k_param, c["dim_in"], c["dim_k"])
        ref = _reference(query, key, value, params)

        # Exact f32 path: tight verification of the module's semantics.
        out_f32 = jax.block_until_ready(attention_head(
            query, key, value, params, compute_dtype=jnp.float32,
            tile_q_max=c["tile_q_max"], tile_kv_max=c["tile_kv_max"]))
        _check(f"case{idx}/f32", out_f32, ref, atol=1e-4, rtol=1e-4)

        # Fast bf16 MXU path (default): looser tolerance from bf16 rounding.
        out_bf16 = jax.block_until_ready(attention_head(
            query, key, value, params,
            tile_q_max=c["tile_q_max"], tile_kv_max=c["tile_kv_max"]))
        _check(f"case{idx}/bf16", out_bf16, ref, atol=3e-2, rtol=3e-2)

    print("KERNEL_OK")
</pallas_src>

<mosaic_0001>
module attributes {stable_mosaic.version = 11 : i64} {
  func.func @_project_kernel(%arg0: i32, %arg1: i32, %arg2: memref<1x16x32xf32, #tpu.memory_space<vmem>>, %arg3: memref<1x16x32xf32, #tpu.memory_space<vmem>>, %arg4: memref<1x16x32xf32, #tpu.memory_space<vmem>>, %arg5: memref<32x128xf32, #tpu.memory_space<vmem>>, %arg6: memref<1x128xf32, #tpu.memory_space<vmem>>, %arg7: memref<32x128xf32, #tpu.memory_space<vmem>>, %arg8: memref<1x128xf32, #tpu.memory_space<vmem>>, %arg9: memref<32x128xf32, #tpu.memory_space<vmem>>, %arg10: memref<1x128xf32, #tpu.memory_space<vmem>>, %arg11: memref<1x16x128xf32, #tpu.memory_space<vmem>>, %arg12: memref<1x16x128xf32, #tpu.memory_space<vmem>>, %arg13: memref<1x16x128xf32, #tpu.memory_space<vmem>>) attributes {dimension_semantics = [#tpu.dimension_semantics<parallel>, #tpu.dimension_semantics<parallel>], iteration_bounds = array<i64: 2, 1>, scalar_prefetch = 0 : i64, scratch_operands = 0 : i64, tpu.core_type = #tpu.core_type<tc>, window_params = [{transform_indices = @transform_0, window_bounds = array<i64: 1, 16, 32>}, {transform_indices = @transform_1, window_bounds = array<i64: 1, 16, 32>}, {transform_indices = @transform_2, window_bounds = array<i64: 1, 16, 32>}, {pipeline_mode = #tpu.pipeline_mode<synchronous>, transform_indices = @transform_3, window_bounds = array<i64: 32, 128>}, {pipeline_mode = #tpu.pipeline_mode<synchronous>, transform_indices = @transform_4, window_bounds = array<i64: 1, 128>}, {pipeline_mode = #tpu.pipeline_mode<synchronous>, transform_indices = @transform_5, window_bounds = array<i64: 32, 128>}, {pipeline_mode = #tpu.pipeline_mode<synchronous>, transform_indices = @transform_6, window_bounds = array<i64: 1, 128>}, {pipeline_mode = #tpu.pipeline_mode<synchronous>, transform_indices = @transform_7, window_bounds = array<i64: 32, 128>}, {pipeline_mode = #tpu.pipeline_mode<synchronous>, transform_indices = @transform_8, window_bounds = array<i64: 1, 128>}, {transform_indices = @transform_9, window_bounds = array<i64: 1, 16, 128>}, {transform_indices = @transform_10, window_bounds = array<i64: 1, 16, 128>}, {transform_indices = @transform_11, window_bounds = array<i64: 1, 16, 128>}]} {
    %c0 = arith.constant 0 : index
    %c0_0 = arith.constant 0 : index
    %c0_1 = arith.constant 0 : index
    %0 = vector.load %arg2[%c0, %c0_0, %c0_1] : memref<1x16x32xf32, #tpu.memory_space<vmem>>, vector<1x16x32xf32>
    %1 = vector.shape_cast %0 : vector<1x16x32xf32> to vector<16x32xf32>
    %c0_2 = arith.constant 0 : index
    %c0_3 = arith.constant 0 : index
    %c0_4 = arith.constant 0 : index
    %2 = vector.load %arg3[%c0_2, %c0_3, %c0_4] : memref<1x16x32xf32, #tpu.memory_space<vmem>>, vector<1x16x32xf32>
    %3 = vector.shape_cast %2 : vector<1x16x32xf32> to vector<16x32xf32>
    %c0_5 = arith.constant 0 : index
    %c0_6 = arith.constant 0 : index
    %c0_7 = arith.constant 0 : index
    %4 = vector.load %arg4[%c0_5, %c0_6, %c0_7] : memref<1x16x32xf32, #tpu.memory_space<vmem>>, vector<1x16x32xf32>
    %5 = vector.shape_cast %4 : vector<1x16x32xf32> to vector<16x32xf32>
    %c0_8 = arith.constant 0 : index
    %c0_9 = arith.constant 0 : index
    %6 = vector.load %arg5[%c0_8, %c0_9] : memref<32x128xf32, #tpu.memory_space<vmem>>, vector<32x128xf32>
    %cst = arith.constant dense<0.000000e+00> : vector<16x128xf32>
    %7 = tpu.matmul %1, %6, %cst {dimension_numbers = #tpu.dot_dimension_numbers<[1], [0], [0], [1], [0, 0, 1, 1], [], []>} : vector<16x32xf32>, vector<32x128xf32>, vector<16x128xf32> -> vector<16x128xf32>
    %c0_10 = arith.constant 0 : index
    %c0_11 = arith.constant 0 : index
    %8 = vector.load %arg6[%c0_10, %c0_11] : memref<1x128xf32, #tpu.memory_space<vmem>>, vector<1x128xf32>
    %9 = vector.broadcast %8 : vector<1x128xf32> to vector<16x128xf32>
    %10 = arith.addf %7, %9 : vector<16x128xf32>
    %c0_12 = arith.constant 0 : index
    %c0_13 = arith.constant 0 : index
    %11 = vector.load %arg7[%c0_12, %c0_13] : memref<32x128xf32, #tpu.memory_space<vmem>>, vector<32x128xf32>
    %cst_14 = arith.constant dense<0.000000e+00> : vector<16x128xf32>
    %12 = tpu.matmul %3, %11, %cst_14 {dimension_numbers = #tpu.dot_dimension_numbers<[1], [0], [0], [1], [0, 0, 1, 1], [], []>} : vector<16x32xf32>, vector<32x128xf32>, vector<16x128xf32> -> vector<16x128xf32>
    %c0_15 = arith.constant 0 : index
    %c0_16 = arith.constant 0 : index
    %13 = vector.load %arg8[%c0_15, %c0_16] : memref<1x128xf32, #tpu.memory_space<vmem>>, vector<1x128xf32>
    %14 = vector.broadcast %13 : vector<1x128xf32> to vector<16x128xf32>
    %15 = arith.addf %12, %14 : vector<16x128xf32>
    %c0_17 = arith.constant 0 : index
    %c0_18 = arith.constant 0 : index
    %16 = vector.load %arg9[%c0_17, %c0_18] : memref<32x128xf32, #tpu.memory_space<vmem>>, vector<32x128xf32>
    %cst_19 = arith.constant dense<0.000000e+00> : vector<16x128xf32>
    %17 = tpu.matmul %5, %16, %cst_19 {dimension_numbers = #tpu.dot_dimension_numbers<[1], [0], [0], [1], [0, 0, 1, 1], [], []>} : vector<16x32xf32>, vector<32x128xf32>, vector<16x128xf32> -> vector<16x128xf32>
    %c0_20 = arith.constant 0 : index
    %c0_21 = arith.constant 0 : index
    %18 = vector.load %arg10[%c0_20, %c0_21] : memref<1x128xf32, #tpu.memory_space<vmem>>, vector<1x128xf32>
    %19 = vector.broadcast %18 : vector<1x128xf32> to vector<16x128xf32>
    %20 = arith.addf %17, %19 : vector<16x128xf32>
    %cst_22 = arith.constant 2.500000e-01 : f32
    %21 = vector.broadcast %cst_22 : f32 to vector<16x128xf32>
    %22 = arith.mulf %10, %21 : vector<16x128xf32>
    %c0_23 = arith.constant 0 : index
    %c0_24 = arith.constant 0 : index
    %c0_25 = arith.constant 0 : index
    %23 = vector.load %arg11[%c0_23, %c0_24, %c0_25] : memref<1x16x128xf32, #tpu.memory_space<vmem>>, vector<1x16x128xf32>
    %24 = vector.shape_cast %23 : vector<1x16x128xf32> to vector<16x128xf32>
    %25 = vector.shape_cast %22 : vector<16x128xf32> to vector<1x16x128xf32>
    tpu.vector_store %arg11[%c0_23, %c0_24, %c0_25], %25 {strides = array<i32>} : memref<1x16x128xf32, #tpu.memory_space<vmem>>, vector<1x16x128xf32>,
    %c0_26 = arith.constant 0 : index
    %c0_27 = arith.constant 0 : index
    %c0_28 = arith.constant 0 : index
    %26 = vector.load %arg12[%c0_26, %c0_27, %c0_28] : memref<1x16x128xf32, #tpu.memory_space<vmem>>, vector<1x16x128xf32>
    %27 = vector.shape_cast %26 : vector<1x16x128xf32> to vector<16x128xf32>
    %28 = vector.shape_cast %15 : vector<16x128xf32> to vector<1x16x128xf32>
    tpu.vector_store %arg12[%c0_26, %c0_27, %c0_28], %28 {strides = array<i32>} : memref<1x16x128xf32, #tpu.memory_space<vmem>>, vector<1x16x128xf32>,
    %c0_29 = arith.constant 0 : index
    %c0_30 = arith.constant 0 : index
    %c0_31 = arith.constant 0 : index
    %29 = vector.load %arg13[%c0_29, %c0_30, %c0_31] : memref<1x16x128xf32, #tpu.memory_space<vmem>>, vector<1x16x128xf32>
    %30 = vector.shape_cast %29 : vector<1x16x128xf32> to vector<16x128xf32>
    %31 = vector.shape_cast %20 : vector<16x128xf32> to vector<1x16x128xf32>
    tpu.vector_store %arg13[%c0_29, %c0_30, %c0_31], %31 {strides = array<i32>} : memref<1x16x128xf32, #tpu.memory_space<vmem>>, vector<1x16x128xf32>,
    return
  }
  func.func @transform_0(%arg0: i32, %arg1: i32) -> (i32, i32, i32) {
    %c0_i32 = arith.constant 0 : i32
    %c0_i32_0 = arith.constant 0 : i32
    return %arg0, %arg1, %c0_i32 : i32, i32, i32
  }
  func.func @transform_1(%arg0: i32, %arg1: i32) -> (i32, i32, i32) {
    %c0_i32 = arith.constant 0 : i32
    %c0_i32_0 = arith.constant 0 : i32
    return %arg0, %arg1, %c0_i32 : i32, i32, i32
  }
  func.func @transform_2(%arg0: i32, %arg1: i32) -> (i32, i32, i32) {
    %c0_i32 = arith.constant 0 : i32
    %c0_i32_0 = arith.constant 0 : i32
    return %arg0, %arg1, %c0_i32 : i32, i32, i32
  }
  func.func @transform_3(%arg0: i32, %arg1: i32) -> (i32, i32) {
    %c0_i32 = arith.constant 0 : i32
    %c0_i32_0 = arith.constant 0 : i32
    %c0_i32_1 = arith.constant 0 : i32
    return %c0_i32, %c0_i32_0 : i32, i32
  }
  func.func @transform_4(%arg0: i32, %arg1: i32) -> (i32, i32) {
    %c0_i32 = arith.constant 0 : i32
    %c0_i32_0 = arith.constant 0 : i32
    %c0_i32_1 = arith.constant 0 : i32
    return %c0_i32, %c0_i32_0 : i32, i32
  }
  func.func @transform_5(%arg0: i32, %arg1: i32) -> (i32, i32) {
    %c0_i32 = arith.constant 0 : i32
    %c0_i32_0 = arith.constant 0 : i32
    %c0_i32_1 = arith.constant 0 : i32
    return %c0_i32, %c0_i32_0 : i32, i32
  }
  func.func @transform_6(%arg0: i32, %arg1: i32) -> (i32, i32) {
    %c0_i32 = arith.constant 0 : i32
    %c0_i32_0 = arith.constant 0 : i32
    %c0_i32_1 = arith.constant 0 : i32
    return %c0_i32, %c0_i32_0 : i32, i32
  }
  func.func @transform_7(%arg0: i32, %arg1: i32) -> (i32, i32) {
    %c0_i32 = arith.constant 0 : i32
    %c0_i32_0 = arith.constant 0 : i32
    %c0_i32_1 = arith.constant 0 : i32
    return %c0_i32, %c0_i32_0 : i32, i32
  }
  func.func @transform_8(%arg0: i32, %arg1: i32) -> (i32, i32) {
    %c0_i32 = arith.constant 0 : i32
    %c0_i32_0 = arith.constant 0 : i32
    %c0_i32_1 = arith.constant 0 : i32
    return %c0_i32, %c0_i32_0 : i32, i32
  }
  func.func @transform_9(%arg0: i32, %arg1: i32) -> (i32, i32, i32) {
    %c0_i32 = arith.constant 0 : i32
    %c0_i32_0 = arith.constant 0 : i32
    return %arg0, %arg1, %c0_i32 : i32, i32, i32
  }
  func.func @transform_10(%arg0: i32, %arg1: i32) -> (i32, i32, i32) {
    %c0_i32 = arith.constant 0 : i32
    %c0_i32_0 = arith.constant 0 : i32
    return %arg0, %arg1, %c0_i32 : i32, i32, i32
  }
  func.func @transform_11(%arg0: i32, %arg1: i32) -> (i32, i32, i32) {
    %c0_i32 = arith.constant 0 : i32
    %c0_i32_0 = arith.constant 0 : i32
    return %arg0, %arg1, %c0_i32 : i32, i32, i32
  }
}

</mosaic_0001>

<llo_original>
// kernel: tpu_custom_call.1
$region0: #{tpu_custom_call.1}
  #allocation0 [shape = 'u32[]', space=smem, size = 0x4, offset = 0x4, fixed_abs, tag = 'smem constant byte address 0x4 - core index']
  #allocation1 [shape = 'u32[144,128]{1,0:T(1,128)}', space=vmem, size = 0x12000, scoped, tag = 'internal scratch']
  %s0 = inlined_call_operand.hbm [shape: f32[2,16,32], index: 0, kind: input, shape index: {}]
  %s1 = inlined_call_operand.hbm [shape: f32[2,16,32], index: 1, kind: input, shape index: {}]
  %s2 = inlined_call_operand.hbm [shape: f32[2,16,32], index: 2, kind: input, shape index: {}]
  %s3 = inlined_call_operand.hbm [shape: f32[32,128], index: 3, kind: input, shape index: {}]
  %s4 = inlined_call_operand.vmem [shape: f32[1,128], index: 4, kind: input, shape index: {}]
  %s5 = inlined_call_operand.hbm [shape: f32[32,128], index: 5, kind: input, shape index: {}]
  %s6 = inlined_call_operand.vmem [shape: f32[1,128], index: 6, kind: input, shape index: {}]
  %s7 = inlined_call_operand.hbm [shape: f32[32,128], index: 7, kind: input, shape index: {}]
  %s8 = inlined_call_operand.vmem [shape: f32[1,128], index: 8, kind: input, shape index: {}]
  %s9 = inlined_call_operand.hbm [shape: f32[2,16,128], index: 9, kind: output, shape index: {0}]
  %s10 = inlined_call_operand.hbm [shape: f32[2,16,128], index: 10, kind: output, shape index: {1}]
  %s11 = inlined_call_operand.hbm [shape: f32[2,16,128], index: 11, kind: output, shape index: {2}]
  %12 = xla_tuple %s9, %s10, %s11
  %s13 = sld [smem:[#allocation0]]
  $region109: #{tpu_custom_call.1} parent=0
    _
  %s15 = ssub.s32 1, %s13
  %s16 = scalar_select 0, %s15, %s13
  $region1: #{tpu_custom_call.1} parent=0
    #allocation2 [shape = 'u8[16384]{0}', space=vmem, size = 0x4000, scoped, tag = 'input window, operand 0']
    #allocation3 [shape = 's32[2]{0}', space=sflag, size = 0x8, scoped, tag = 'scoped memory for tpu_custom_call.1']
    #allocation4 [shape = 's32[2]{0}', space=sflag, size = 0x8, scoped, tag = 'scoped memory for tpu_custom_call.1']
    #allocation5 [shape = 'u8[16384]{0}', space=vmem, size = 0x4000, scoped, tag = 'input window, operand 1']
    #allocation6 [shape = 's32[2]{0}', space=sflag, size = 0x8, scoped, tag = 'scoped memory for tpu_custom_call.1']
    #allocation7 [shape = 'u8[16384]{0}', space=vmem, size = 0x4000, scoped, tag = 'input window, operand 2']
    #allocation8 [shape = 'u8[16384]{0}', space=vmem, size = 0x4000, scoped, tag = 'input window, operand 3, single buffered']
    #allocation9 [shape = 's32[1]{0}', space=sflag, size = 0x4, scoped, tag = 'scoped memory for tpu_custom_call.1']
    #allocation10 [shape = 'u8[16384]{0}', space=vmem, size = 0x4000, scoped, tag = 'input window, operand 5, single buffered']
    #allocation11 [shape = 'u8[16384]{0}', space=vmem, size = 0x4000, scoped, tag = 'input window, operand 7, single buffered']
    #allocation12 [shape = 's32[1]{0}', space=sflag, size = 0x4, scoped, tag = 'scoped memory for tpu_custom_call.1']
    #allocation13 [shape = 'u8[16384]{0}', space=vmem, size = 0x4000, scoped, tag = 'output window, operand 0']
    #allocation14 [shape = 'u8[16384]{0}', space=vmem, size = 0x4000, scoped, tag = 'output window, operand 1']
    #allocation15 [shape = 's32[2]{0}', space=sflag, size = 0x8, scoped, tag = 'scoped memory for tpu_custom_call.1']
    #allocation16 [shape = 'u8[16384]{0}', space=vmem, size = 0x4000, scoped, tag = 'output window, operand 2']
    %17 = vsyncpa [#allocation3], 0
    %s18 = scalar_lea.sflag [#allocation3], 1
    %19 = vsyncpa %s18, 0
    %20 = vsyncpa [#allocation6], 0
    %s21 = scalar_lea.sflag [#allocation6], 1
    %22 = vsyncpa %s21, 0
    %23 = vsyncpa [#allocation9], 0
    %24 = vsyncpa [#allocation12], 0
    %25 = vsyncpa [#allocation4], 0
    %s26 = scalar_lea.sflag [#allocation4], 1
    %27 = vsyncpa %s26, 0
    %28 = vsyncpa [#allocation15], 0
    %s29 = scalar_lea.sflag [#allocation15], 1
    %30 = vsyncpa %s29, 0
    loop: start=0, step=1, limit=4
    $region2: #{tpu_custom_call.1} parent=1 // loop_pre_header
      _
    $region3: #{tpu_custom_call.1} parent=1 // loop_header
      %s32 = sphi 0, %s36
      %p33 = scmp.ge.s32.totalorder %s32, 4
      %s39 = sphi 0, %s51
      %s40 = sphi 0, %s47
      %s41 = sphi 0, %s39
      %s42 = sphi 0, %s40
      %s43 = sphi 0, %s41
      %s44 = sphi 0, %s42
      %s56 = sphi 0, %s58
      %s59 = sphi 0, %s56
      %s60 = sphi 0, %s59
      %s76 = sphi 0, %s60
      %s84 = sphi 0, %s86
      %s87 = sphi 0, %s84
      %s88 = sphi 0, %s87
      %s104 = sphi 0, %s88
      %s112 = sphi 0, %s114
      %s115 = sphi 0, %s112
      %s116 = sphi 0, %s115
      %s132 = sphi 0, %s116
      %s136 = sphi 0, %s136
      %s138 = sphi 0, %s136
      %s139 = sphi 0, %s138
      %s153 = sphi 0, %s139
      %s157 = sphi 0, %s157
      %s159 = sphi 0, %s157
      %s160 = sphi 0, %s159
      %s174 = sphi 0, %s160
      %s178 = sphi 0, %s178
      %s180 = sphi 0, %s178
      %s181 = sphi 0, %s180
      %s195 = sphi 0, %s181
      %s199 = sphi 0, %s199
      %s201 = sphi 0, %s199
      %s202 = sphi 0, %s201
      %s216 = sphi 0, %s202
      %s220 = sphi 0, %s220
      %s222 = sphi 0, %s220
      %s223 = sphi 0, %s222
      %s237 = sphi 0, %s223
      %s241 = sphi 0, %s241
      %s243 = sphi 0, %s241
      %s244 = sphi 0, %s243
      %s258 = sphi 0, %s244
      %s266 = sphi 0, %s268
      %s269 = sphi 0, %s266
      %s270 = sphi 0, %s269
      %s286 = sphi 0, %s270
      %s294 = sphi 0, %s296
      %s297 = sphi 0, %s294
      %s298 = sphi 0, %s297
      %s314 = sphi 0, %s298
      %s322 = sphi 0, %s324
      %s325 = sphi 0, %s322
      %s326 = sphi 0, %s325
      %s342 = sphi 0, %s326
    $region4: #{tpu_custom_call.1} parent=1 // loop_header_branch
      %35 = sbr.rel (%p33) target = $region8
    $region5: #{tpu_custom_call.1} parent=1 // loop_body
      %s37 = ssub.s32 %s32, 1
      %s38 = ssub.s32 %s32, 2
      %s45 = sadd.s32 1, %s40
      %p46 = scmp.ge.s32.totalorder %s45, 1
      %s47 = scalar_select %p46, 0, %s45
      %s48 = sadd.s32 1, %s39
      %s49 = scalar_select %p46, %s48, %s39
      %p50 = scmp.ge.s32.totalorder %s49, 2
      %s51 = scalar_select %p50, 0, %s49
      %s52 = ssub.s32 %s39, %s51
      %s53 = ssub.s32 %s40, %s47
      %s54 = sor.u32 %s52, %s53
      %p55 = scmp.eq.s32.totalorder %s54, 0
      %s57 = sadd.s32 %s56, 1
      %s58 = scalar_select %p55, %s56, %s57
      %p61 = pneg %p55
      %p62 = scmp.eq.s32.totalorder %s32, 1
      %p63 = por %p61, %p62
      %p64 = scmp.ne.s32.totalorder %s56, %s59
      %p65 = scmp.eq.s32.totalorder %s32, 0
      %p66 = por %p64, %p65
      %p67 = scmp.ne.s32.totalorder %s56, %s59
      %p68 = scmp.eq.s32.totalorder %s37, 1
      %p69 = por %p67, %p68
      %p70 = scmp.ne.s32.totalorder %s59, %s60
      %p71 = scmp.eq.s32.totalorder %s37, 0
      %p72 = por %p70, %p71
      %p73 = scmp.ne.s32.totalorder %s59, %s60
      %p74 = scmp.eq.s32.totalorder %s38, 1
      %p75 = por %p73, %p74
      %p77 = scmp.ne.s32.totalorder %s60, %s76
      %p78 = scmp.eq.s32.totalorder %s38, 0
      %p79 = por %p77, %p78
      %s80 = ssub.s32 %s39, %s51
      %s81 = ssub.s32 %s40, %s47
      %s82 = sor.u32 %s80, %s81
      %p83 = scmp.eq.s32.totalorder %s82, 0
      %s85 = sadd.s32 %s84, 1
      %s86 = scalar_select %p83, %s84, %s85
      %p89 = pneg %p83
      %p90 = scmp.eq.s32.totalorder %s32, 1
      %p91 = por %p89, %p90
      %p92 = scmp.ne.s32.totalorder %s84, %s87
      %p93 = scmp.eq.s32.totalorder %s32, 0
      %p94 = por %p92, %p93
      %p95 = scmp.ne.s32.totalorder %s84, %s87
      %p96 = scmp.eq.s32.totalorder %s37, 1
      %p97 = por %p95, %p96
      %p98 = scmp.ne.s32.totalorder %s87, %s88
      %p99 = scmp.eq.s32.totalorder %s37, 0
      %p100 = por %p98, %p99
      %p101 = scmp.ne.s32.totalorder %s87, %s88
      %p102 = scmp.eq.s32.totalorder %s38, 1
      %p103 = por %p101, %p102
      %p105 = scmp.ne.s32.totalorder %s88, %s104
      %p106 = scmp.eq.s32.totalorder %s38, 0
      %p107 = por %p105, %p106
      %s108 = ssub.s32 %s39, %s51
      %s109 = ssub.s32 %s40, %s47
      %s110 = sor.u32 %s108, %s109
      %p111 = scmp.eq.s32.totalorder %s110, 0
      %s113 = sadd.s32 %s112, 1
      %s114 = scalar_select %p111, %s112, %s113
      %p117 = pneg %p111
      %p118 = scmp.eq.s32.totalorder %s32, 1
      %p119 = por %p117, %p118
      %p120 = scmp.ne.s32.totalorder %s112, %s115
      %p121 = scmp.eq.s32.totalorder %s32, 0
      %p122 = por %p120, %p121
      %p123 = scmp.ne.s32.totalorder %s112, %s115
      %p124 = scmp.eq.s32.totalorder %s37, 1
      %p125 = por %p123, %p124
      %p126 = scmp.ne.s32.totalorder %s115, %s116
      %p127 = scmp.eq.s32.totalorder %s37, 0
      %p128 = por %p126, %p127
      %p129 = scmp.ne.s32.totalorder %s115, %s116
      %p130 = scmp.eq.s32.totalorder %s38, 1
      %p131 = por %p129, %p130
      %p133 = scmp.ne.s32.totalorder %s116, %s132
      %p134 = scmp.eq.s32.totalorder %s38, 0
      %p135 = por %p133, %p134
      %s137 = sadd.s32 %s136, 1
      %p140 = scmp.eq.s32.totalorder %s32, 1
      %p141 = scmp.ne.s32.totalorder %s136, %s138
      %p142 = scmp.eq.s32.totalorder %s32, 0
      %p143 = por %p141, %p142
      %p144 = scmp.ne.s32.totalorder %s136, %s138
      %p145 = scmp.eq.s32.totalorder %s37, 1
      %p146 = por %p144, %p145
      %p147 = scmp.ne.s32.totalorder %s138, %s139
      %p148 = scmp.eq.s32.totalorder %s37, 0
      %p149 = por %p147, %p148
      %p150 = scmp.ne.s32.totalorder %s138, %s139
      %p151 = scmp.eq.s32.totalorder %s38, 1
      %p152 = por %p150, %p151
      %p154 = scmp.ne.s32.totalorder %s139, %s153
      %p155 = scmp.eq.s32.totalorder %s38, 0
      %p156 = por %p154, %p155
      %s158 = sadd.s32 %s157, 1
      %p161 = scmp.eq.s32.totalorder %s32, 1
      %p162 = scmp.ne.s32.totalorder %s157, %s159
      %p163 = scmp.eq.s32.totalorder %s32, 0
      %p164 = por %p162, %p163
      %p165 = scmp.ne.s32.totalorder %s157, %s159
      %p166 = scmp.eq.s32.totalorder %s37, 1
      %p167 = por %p165, %p166
      %p168 = scmp.ne.s32.totalorder %s159, %s160
      %p169 = scmp.eq.s32.totalorder %s37, 0
      %p170 = por %p168, %p169
      %p171 = scmp.ne.s32.totalorder %s159, %s160
      %p172 = scmp.eq.s32.totalorder %s38, 1
      %p173 = por %p171, %p172
      %p175 = scmp.ne.s32.totalorder %s160, %s174
      %p176 = scmp.eq.s32.totalorder %s38, 0
      %p177 = por %p175, %p176
      %s179 = sadd.s32 %s178, 1
      %p182 = scmp.eq.s32.totalorder %s32, 1
      %p183 = scmp.ne.s32.totalorder %s178, %s180
      %p184 = scmp.eq.s32.totalorder %s32, 0
      %p185 = por %p183, %p184
      %p186 = scmp.ne.s32.totalorder %s178, %s180
      %p187 = scmp.eq.s32.totalorder %s37, 1
      %p188 = por %p186, %p187
      %p189 = scmp.ne.s32.totalorder %s180, %s181
      %p190 = scmp.eq.s32.totalorder %s37, 0
      %p191 = por %p189, %p190
      %p192 = scmp.ne.s32.totalorder %s180, %s181
      %p193 = scmp.eq.s32.totalorder %s38, 1
      %p194 = por %p192, %p193
      %p196 = scmp.ne.s32.totalorder %s181, %s195
      %p197 = scmp.eq.s32.totalorder %s38, 0
      %p198 = por %p196, %p197
      %s200 = sadd.s32 %s199, 1
      %p203 = scmp.eq.s32.totalorder %s32, 1
      %p204 = scmp.ne.s32.totalorder %s199, %s201
      %p205 = scmp.eq.s32.totalorder %s32, 0
      %p206 = por %p204, %p205
      %p207 = scmp.ne.s32.totalorder %s199, %s201
      %p208 = scmp.eq.s32.totalorder %s37, 1
      %p209 = por %p207, %p208
      %p210 = scmp.ne.s32.totalorder %s201, %s202
      %p211 = scmp.eq.s32.totalorder %s37, 0
      %p212 = por %p210, %p211
      %p213 = scmp.ne.s32.totalorder %s201, %s202
      %p214 = scmp.eq.s32.totalorder %s38, 1
      %p215 = por %p213, %p214
      %p217 = scmp.ne.s32.totalorder %s202, %s216
      %p218 = scmp.eq.s32.totalorder %s38, 0
      %p219 = por %p217, %p218
      %s221 = sadd.s32 %s220, 1
      %p224 = scmp.eq.s32.totalorder %s32, 1
      %p225 = scmp.ne.s32.totalorder %s220, %s222
      %p226 = scmp.eq.s32.totalorder %s32, 0
      %p227 = por %p225, %p226
      %p228 = scmp.ne.s32.totalorder %s220, %s222
      %p229 = scmp.eq.s32.totalorder %s37, 1
      %p230 = por %p228, %p229
      %p231 = scmp.ne.s32.totalorder %s222, %s223
      %p232 = scmp.eq.s32.totalorder %s37, 0
      %p233 = por %p231, %p232
      %p234 = scmp.ne.s32.totalorder %s222, %s223
      %p235 = scmp.eq.s32.totalorder %s38, 1
      %p236 = por %p234, %p235
      %p238 = scmp.ne.s32.totalorder %s223, %s237
      %p239 = scmp.eq.s32.totalorder %s38, 0
      %p240 = por %p238, %p239
      %s242 = sadd.s32 %s241, 1
      %p245 = scmp.eq.s32.totalorder %s32, 1
      %p246 = scmp.ne.s32.totalorder %s241, %s243
      %p247 = scmp.eq.s32.totalorder %s32, 0
      %p248 = por %p246, %p247
      %p249 = scmp.ne.s32.totalorder %s241, %s243
      %p250 = scmp.eq.s32.totalorder %s37, 1
      %p251 = por %p249, %p250
      %p252 = scmp.ne.s32.totalorder %s243, %s244
      %p253 = scmp.eq.s32.totalorder %s37, 0
      %p254 = por %p252, %p253
      %p255 = scmp.ne.s32.totalorder %s243, %s244
      %p256 = scmp.eq.s32.totalorder %s38, 1
      %p257 = por %p255, %p256
      %p259 = scmp.ne.s32.totalorder %s244, %s258
      %p260 = scmp.eq.s32.totalorder %s38, 0
      %p261 = por %p259, %p260
      %s262 = ssub.s32 %s39, %s51
      %s263 = ssub.s32 %s40, %s47
      %s264 = sor.u32 %s262, %s263
      %p265 = scmp.eq.s32.totalorder %s264, 0
      %s267 = sadd.s32 %s266, 1
      %s268 = scalar_select %p265, %s266, %s267
      %p271 = pneg %p265
      %p272 = scmp.eq.s32.totalorder %s32, 1
      %p273 = por %p271, %p272
      %p274 = scmp.ne.s32.totalorder %s266, %s269
      %p275 = scmp.eq.s32.totalorder %s32, 0
      %p276 = por %p274, %p275
      %p277 = scmp.ne.s32.totalorder %s266, %s269
      %p278 = scmp.eq.s32.totalorder %s37, 1
      %p279 = por %p277, %p278
      %p280 = scmp.ne.s32.totalorder %s269, %s270
      %p281 = scmp.eq.s32.totalorder %s37, 0
      %p282 = por %p280, %p281
      %p283 = scmp.ne.s32.totalorder %s269, %s270
      %p284 = scmp.eq.s32.totalorder %s38, 1
      %p285 = por %p283, %p284
      %p287 = scmp.ne.s32.totalorder %s270, %s286
      %p288 = scmp.eq.s32.totalorder %s38, 0
      %p289 = por %p287, %p288
      %s290 = ssub.s32 %s39, %s51
      %s291 = ssub.s32 %s40, %s47
      %s292 = sor.u32 %s290, %s291
      %p293 = scmp.eq.s32.totalorder %s292, 0
      %s295 = sadd.s32 %s294, 1
      %s296 = scalar_select %p293, %s294, %s295
      %p299 = pneg %p293
      %p300 = scmp.eq.s32.totalorder %s32, 1
      %p301 = por %p299, %p300
      %p302 = scmp.ne.s32.totalorder %s294, %s297
      %p303 = scmp.eq.s32.totalorder %s32, 0
      %p304 = por %p302, %p303
      %p305 = scmp.ne.s32.totalorder %s294, %s297
      %p306 = scmp.eq.s32.totalorder %s37, 1
      %p307 = por %p305, %p306
      %p308 = scmp.ne.s32.totalorder %s297, %s298
      %p309 = scmp.eq.s32.totalorder %s37, 0
      %p310 = por %p308, %p309
      %p311 = scmp.ne.s32.totalorder %s297, %s298
      %p312 = scmp.eq.s32.totalorder %s38, 1
      %p313 = por %p311, %p312
      %p315 = scmp.ne.s32.totalorder %s298, %s314
      %p316 = scmp.eq.s32.totalorder %s38, 0
      %p317 = por %p315, %p316
      %s318 = ssub.s32 %s39, %s51
      %s319 = ssub.s32 %s40, %s47
      %s320 = sor.u32 %s318, %s319
      %p321 = scmp.eq.s32.totalorder %s320, 0
      %s323 = sadd.s32 %s322, 1
      %s324 = scalar_select %p321, %s322, %s323
      %p327 = pneg %p321
      %p328 = scmp.eq.s32.totalorder %s32, 1
      %p329 = por %p327, %p328
      %p330 = scmp.ne.s32.totalorder %s322, %s325
      %p331 = scmp.eq.s32.totalorder %s32, 0
      %p332 = por %p330, %p331
      %p333 = scmp.ne.s32.totalorder %s322, %s325
      %p334 = scmp.eq.s32.totalorder %s37, 1
      %p335 = por %p333, %p334
      %p336 = scmp.ne.s32.totalorder %s325, %s326
      %p337 = scmp.eq.s32.totalorder %s37, 0
      %p338 = por %p336, %p337
      %p339 = scmp.ne.s32.totalorder %s325, %s326
      %p340 = scmp.eq.s32.totalorder %s38, 1
      %p341 = por %p339, %p340
      %p343 = scmp.ne.s32.totalorder %s326, %s342
      %p344 = scmp.eq.s32.totalorder %s38, 0
      %p345 = por %p343, %p344
      %p346 = scmp.le.s32.totalorder 1, %s32
      %p347 = scmp.lt.s32.totalorder %s32, 3
      %p348 = pnand %p346, %p347
      %p349 = pneg %p348
      // Predicated region
      $region9: #{tpu_custom_call.1} parent=5 // pred_check
        _
      $region10: #{tpu_custom_call.1} parent=5 // pred_check_branch
        %351 = sbr.rel (%p348) target = $region12
      $region11: #{tpu_custom_call.1} parent=5 // pred_region
        %s352 = ssub.s32 %s32, 1
        // Predicated region
        $region13: #{tpu_custom_call.1} parent=11 // pred_check
          %p353 = pneg %p149
        $region14: #{tpu_custom_call.1} parent=11 // pred_check_branch
          %355 = sbr.rel (%p353) target = $region16
        $region15: #{tpu_custom_call.1} parent=11 // pred_region
          %s357 = ssub.s32 512, 512
          %358 = vsyncadd [#allocation9], %s357
          %s359 = sshll.u32 [#allocation8], 4
          %s360 = int_to_ptr.vmem [resolvable:$true] %s359
          %365 = dma.hbm_to_vmem [thread:$0]  %s3, 512, %s360, [#allocation9], 128, 128, 8
        $region16: #{tpu_custom_call.1} parent=11 // pred_fallthru
          _
        // Predicated region
        $region17: #{tpu_custom_call.1} parent=11 // pred_check
          %p366 = pneg %p170
        $region18: #{tpu_custom_call.1} parent=11 // pred_check_branch
          %368 = sbr.rel (%p366) target = $region20
        $region19: #{tpu_custom_call.1} parent=11 // pred_region
          _
        $region20: #{tpu_custom_call.1} parent=11 // pred_fallthru
          _
        // Predicated region
        $region21: #{tpu_custom_call.1} parent=11 // pred_check
          %p369 = pneg %p191
        $region22: #{tpu_custom_call.1} parent=11 // pred_check_branch
          %371 = sbr.rel (%p369) target = $region24
        $region23: #{tpu_custom_call.1} parent=11 // pred_region
          %s373 = ssub.s32 512, 512
          %374 = vsyncadd [#allocation9], %s373
          %s375 = sshll.u32 [#allocation10], 4
          %s376 = int_to_ptr.vmem [resolvable:$true] %s375
          %381 = dma.hbm_to_vmem [thread:$0]  %s5, 512, %s376, [#allocation9], 128, 128, 8
        $region24: #{tpu_custom_call.1} parent=11 // pred_fallthru
          _
        // Predicated region
        $region25: #{tpu_custom_call.1} parent=11 // pred_check
          %p382 = pneg %p212
        $region26: #{tpu_custom_call.1} parent=11 // pred_check_branch
          %384 = sbr.rel (%p382) target = $region28
        $region27: #{tpu_custom_call.1} parent=11 // pred_region
          _
        $region28: #{tpu_custom_call.1} parent=11 // pred_fallthru
          _
        // Predicated region
        $region29: #{tpu_custom_call.1} parent=11 // pred_check
          %p385 = pneg %p233
        $region30: #{tpu_custom_call.1} parent=11 // pred_check_branch
          %387 = sbr.rel (%p385) target = $region32
        $region31: #{tpu_custom_call.1} parent=11 // pred_region
          %s389 = ssub.s32 512, 512
          %390 = vsyncadd [#allocation12], %s389
          %s391 = sshll.u32 [#allocation11], 4
          %s392 = int_to_ptr.vmem [resolvable:$true] %s391
          %397 = dma.hbm_to_vmem [thread:$0]  %s7, 512, %s392, [#allocation12], 128, 128, 8
        $region32: #{tpu_custom_call.1} parent=11 // pred_fallthru
          _
        // Predicated region
        $region33: #{tpu_custom_call.1} parent=11 // pred_check
          %p398 = pneg %p254
        $region34: #{tpu_custom_call.1} parent=11 // pred_check_branch
          %400 = sbr.rel (%p398) target = $region36
        $region35: #{tpu_custom_call.1} parent=11 // pred_region
          _
        $region36: #{tpu_custom_call.1} parent=11 // pred_fallthru
          _
      $region12: #{tpu_custom_call.1} parent=5 // pred_fallthru
        _
      %p401 = scmp.lt.s32.totalorder %s32, 2
      // Predicated region
      $region37: #{tpu_custom_call.1} parent=5 // pred_check
        %p402 = pneg %p401
      $region38: #{tpu_custom_call.1} parent=5 // pred_check_branch
        %404 = sbr.rel (%p402) target = $region40
      $region39: #{tpu_custom_call.1} parent=5 // pred_region
        // Predicated region
        $region41: #{tpu_custom_call.1} parent=39 // pred_check
          %p405 = pneg %p66
        $region42: #{tpu_custom_call.1} parent=39 // pred_check_branch
          %407 = sbr.rel (%p405) target = $region44
        $region43: #{tpu_custom_call.1} parent=39 // pred_region
          %s408 = sand.u32 %s56, 1
          %s409 = scalar_lea.sflag [#allocation3], %s408
          %s410 = sand.u32 %s56, 1
          %s411 = smul.addr %s410, 16
          %s412 = scalar_lea.vmem [#allocation2], %s411
          %s413 = smul.u32 2, %s40
          %s415 = ssub.s32 256, 256
          %416 = vsyncadd %s409, %s415
          %s417 = smul.addr %s39, 2
          %s418 = sadd.s32 %s413, %s417
          %s419 = smul.addr %s418, 128
          %s420 = scalar_lea.hbm %s0, %s419
          %s421 = sshll.u32 %s412, 4
          %s422 = int_to_ptr.vmem [resolvable:$true] %s421
          %427 = dma.hbm_to_vmem [thread:$0]  %s420, 256, %s422, %s409, 128, 128, 8
        $region44: #{tpu_custom_call.1} parent=39 // pred_fallthru
          _
        // Predicated region
        $region45: #{tpu_custom_call.1} parent=39 // pred_check
          %p428 = pneg %p94
        $region46: #{tpu_custom_call.1} parent=39 // pred_check_branch
          %430 = sbr.rel (%p428) target = $region48
        $region47: #{tpu_custom_call.1} parent=39 // pred_region
          %s431 = sand.u32 %s32, 1
          %s432 = scalar_lea.sflag [#allocation6], %s431
          %s433 = sand.u32 %s84, 1
          %s434 = smul.addr %s433, 16
          %s435 = scalar_lea.vmem [#allocation5], %s434
          %s436 = smul.u32 2, %s40
          %s438 = ssub.s32 256, 256
          %439 = vsyncadd %s432, %s438
          %s440 = smul.addr %s39, 2
          %s441 = sadd.s32 %s436, %s440
          %s442 = smul.addr %s441, 128
          %s443 = scalar_lea.hbm %s1, %s442
          %s444 = sshll.u32 %s435, 4
          %s445 = int_to_ptr.vmem [resolvable:$true] %s444
          %450 = dma.hbm_to_vmem [thread:$0]  %s443, 256, %s445, %s432, 128, 128, 8
        $region48: #{tpu_custom_call.1} parent=39 // pred_fallthru
          _
        // Predicated region
        $region49: #{tpu_custom_call.1} parent=39 // pred_check
          %p451 = pneg %p122
        $region50: #{tpu_custom_call.1} parent=39 // pred_check_branch
          %453 = sbr.rel (%p451) target = $region52
        $region51: #{tpu_custom_call.1} parent=39 // pred_region
          %s454 = sand.u32 %s32, 1
          %s455 = scalar_lea.sflag [#allocation6], %s454
          %s456 = sand.u32 %s112, 1
          %s457 = smul.addr %s456, 16
          %s458 = scalar_lea.vmem [#allocation7], %s457
          %s459 = smul.u32 2, %s40
          %s461 = ssub.s32 256, 256
          %462 = vsyncadd %s455, %s461
          %s463 = smul.addr %s39, 2
          %s464 = sadd.s32 %s459, %s463
          %s465 = smul.addr %s464, 128
          %s466 = scalar_lea.hbm %s2, %s465
          %s467 = sshll.u32 %s458, 4
          %s468 = int_to_ptr.vmem [resolvable:$true] %s467
          %473 = dma.hbm_to_vmem [thread:$0]  %s466, 256, %s468, %s455, 128, 128, 8
        $region52: #{tpu_custom_call.1} parent=39 // pred_fallthru
          _
      $region40: #{tpu_custom_call.1} parent=5 // pred_fallthru
        _
      %p474 = scmp.le.s32.totalorder 1, %s32
      %p475 = scmp.lt.s32.totalorder %s32, 3
      %p476 = pnand %p474, %p475
      %p477 = pneg %p476
      // Predicated region
      $region53: #{tpu_custom_call.1} parent=5 // pred_check
        _
      $region54: #{tpu_custom_call.1} parent=5 // pred_check_branch
        %479 = sbr.rel (%p476) target = $region56
      $region55: #{tpu_custom_call.1} parent=5 // pred_region
        %s480 = ssub.s32 %s32, 1
        %s481 = sand.u32 %s59, 1
        %s482 = scalar_lea.sflag [#allocation3], %s481
        %s483 = sand.u32 %s59, 1
        %s484 = smul.addr %s483, 16
        %s485 = scalar_lea.vmem [#allocation2], %s484
        // Predicated region
        $region57: #{tpu_custom_call.1} parent=55 // pred_check
          %p486 = pneg %p72
        $region58: #{tpu_custom_call.1} parent=55 // pred_check_branch
          %488 = sbr.rel (%p486) target = $region60
        $region59: #{tpu_custom_call.1} parent=55 // pred_region
          %489 = dma.done %s482, 256
        $region60: #{tpu_custom_call.1} parent=55 // pred_fallthru
          _
        %s490 = sand.u32 %s37, 1
        %s491 = scalar_lea.sflag [#allocation6], %s490
        %s492 = sand.u32 %s87, 1
        %s493 = smul.addr %s492, 16
        %s494 = scalar_lea.vmem [#allocation5], %s493
        // Predicated region
        $region61: #{tpu_custom_call.1} parent=55 // pred_check
          %p495 = pneg %p100
        $region62: #{tpu_custom_call.1} parent=55 // pred_check_branch
          %497 = sbr.rel (%p495) target = $region64
        $region63: #{tpu_custom_call.1} parent=55 // pred_region
          %498 = dma.done %s491, 256
        $region64: #{tpu_custom_call.1} parent=55 // pred_fallthru
          _
        %s499 = sand.u32 %s37, 1
        %s500 = scalar_lea.sflag [#allocation6], %s499
        %s501 = sand.u32 %s115, 1
        %s502 = smul.addr %s501, 16
        %s503 = scalar_lea.vmem [#allocation7], %s502
        // Predicated region
        $region65: #{tpu_custom_call.1} parent=55 // pred_check
          %p504 = pneg %p128
        $region66: #{tpu_custom_call.1} parent=55 // pred_check_branch
          %506 = sbr.rel (%p504) target = $region68
        $region67: #{tpu_custom_call.1} parent=55 // pred_region
          %507 = dma.done %s500, 256
        $region68: #{tpu_custom_call.1} parent=55 // pred_fallthru
          _
        // Predicated region
        $region69: #{tpu_custom_call.1} parent=55 // pred_check
          %p508 = pneg %p149
        $region70: #{tpu_custom_call.1} parent=55 // pred_check_branch
          %510 = sbr.rel (%p508) target = $region72
        $region71: #{tpu_custom_call.1} parent=55 // pred_region
          %511 = dma.done [#allocation9], 512
        $region72: #{tpu_custom_call.1} parent=55 // pred_fallthru
          _
        // Predicated region
        $region73: #{tpu_custom_call.1} parent=55 // pred_check
          %p512 = pneg %p191
        $region74: #{tpu_custom_call.1} parent=55 // pred_check_branch
          %514 = sbr.rel (%p512) target = $region76
        $region75: #{tpu_custom_call.1} parent=55 // pred_region
          %515 = dma.done [#allocation9], 512
        $region76: #{tpu_custom_call.1} parent=55 // pred_fallthru
          _
        // Predicated region
        $region77: #{tpu_custom_call.1} parent=55 // pred_check
          %p516 = pneg %p233
        $region78: #{tpu_custom_call.1} parent=55 // pred_check_branch
          %518 = sbr.rel (%p516) target = $region80
        $region79: #{tpu_custom_call.1} parent=55 // pred_region
          %519 = dma.done [#allocation12], 512
        $region80: #{tpu_custom_call.1} parent=55 // pred_fallthru
          _
        %s520 = sand.u32 %s59, 1
        %s521 = scalar_lea.sflag [#allocation3], %s520
        %s522 = sand.u32 %s59, 1
        %s523 = smul.addr %s522, 16
        %s524 = scalar_lea.vmem [#allocation2], %s523
        %p525 = pneg %p72
        %p526 = pneg %p69
        %s527 = sand.u32 %s37, 1
        %s528 = scalar_lea.sflag [#allocation6], %s527
        %s529 = sand.u32 %s87, 1
        %s530 = smul.addr %s529, 16
        %s531 = scalar_lea.vmem [#allocation5], %s530
        %p532 = pneg %p100
        %p533 = pneg %p97
        %s534 = sand.u32 %s37, 1
        %s535 = scalar_lea.sflag [#allocation6], %s534
        %s536 = sand.u32 %s115, 1
        %s537 = smul.addr %s536, 16
        %s538 = scalar_lea.vmem [#allocation7], %s537
        %p539 = pneg %p128
        %p540 = pneg %p125
        %p541 = pneg %p149
        %p542 = pneg %p146
        %p543 = pneg %p170
        %p544 = pneg %p167
        %p545 = pneg %p191
        %p546 = pneg %p188
        %p547 = pneg %p212
        %p548 = pneg %p209
        %p549 = pneg %p233
        %p550 = pneg %p230
        %p551 = pneg %p254
        %p552 = pneg %p251
        %p553 = pneg %p282
        %p554 = pneg %p279
        %s555 = sand.u32 %s269, 1
        %s556 = scalar_lea.sflag [#allocation4], %s555
        %s557 = sand.u32 %s269, 1
        %s558 = smul.addr %s557, 16
        %s559 = scalar_lea.vmem [#allocation13], %s558
        %p560 = pneg %p310
        %p561 = pneg %p307
        %s562 = sand.u32 %s37, 1
        %s563 = scalar_lea.sflag [#allocation15], %s562
        %s564 = sand.u32 %s297, 1
        %s565 = smul.addr %s564, 16
        %s566 = scalar_lea.vmem [#allocation14], %s565
        %p567 = pneg %p338
        %p568 = pneg %p335
        %s569 = sand.u32 %s37, 1
        %s570 = scalar_lea.sflag [#allocation15], %s569
        %s571 = sand.u32 %s325, 1
        %s572 = smul.addr %s571, 16
        %s573 = scalar_lea.vmem [#allocation16], %s572
        %s574 = smul.u32 2, %s42
        %s575 = smul.u32 2, %s42
        %s576 = smul.u32 2, %s42
        %s577 = smul.u32 2, %s42
        %s578 = smul.u32 2, %s42
        %s579 = smul.u32 2, %s42
        %v580 = vld [vmem:[%s485] sm:$0xff]
        %v581 = vld [vmem:[%s485 + $0x8] sm:$0xff]
        %v582 = vld [vmem:[%s494] sm:$0xff]
        %v583 = vld [vmem:[%s494 + $0x8] sm:$0xff]
        %v584 = vld [vmem:[%s503] sm:$0xff]
        %v585 = vld [vmem:[%s503 + $0x8] sm:$0xff]
        %v586 = vld [vmem:[#allocation8] sm:$0xff]
        %v587 = vld [vmem:[#allocation8 + $0x8] sm:$0xff]
        %v588 = vld [vmem:[#allocation8 + $0x10] sm:$0xff]
        %v589 = vld [vmem:[#allocation8 + $0x18] sm:$0xff]
        %v590 = vld [vmem:[%s4] sm:$0x1]
        %v592 = vlaneseq
        %v593 = vshrl.u32 %v592, 7
        %v594 = vsub.s32 0, %v593
        %v595 = vrot.slane %v590, %v594
        %vm597 = vcmask 261120
        %v599 = vsel %vm597, %v580, 0
        %v602 = vsel %vm597, %v581, 0
        %604 = vmatprep.subr.mxu0 0.0
        %605 = vmatpush1.msra.mxu0 %v586
        %606 = vmatprep.subr.mxu0 0.0
        %607 = vmatpush1.msra.mxu0 %v587
        %608 = vmatprep.subr.mxu0 0.0
        %609 = vmatpush1.msra.mxu0 %v588
        %610 = vmatprep.subr.mxu0 0.0
        %611 = vmatpush1.msra.mxu0 %v589
        %612 = vmatprep.subr.mxu0 0.0
        %613 = vmatpush1.msra.mxu0 0.0
        %614 = vmatprep.subr.mxu0 0.0
        %615 = vmatpush1.msra.mxu0 0.0
        %616 = vmatprep.subr.mxu0 0.0
        %617 = vmatpush1.msra.mxu0 0.0
        %618 = vmatprep.subr.mxu0 0.0
        %619 = vmatpush1.msra.mxu0 0.0
        %620 = vmatprep.subr.mxu0 0.0
        %621 = vmatpush1.msra.mxu0 0.0
        %622 = vmatprep.subr.mxu0 0.0
        %623 = vmatpush1.msra.mxu0 0.0
        %624 = vmatprep.subr.mxu0 0.0
        %625 = vmatpush1.msra.mxu0 0.0
        %626 = vmatprep.subr.mxu0 0.0
        %627 = vmatpush1.msra.mxu0 0.0
        %628 = vmatprep.subr.mxu0 0.0
        %629 = vmatpush1.msra.mxu0 0.0
        %630 = vmatprep.subr.mxu0 0.0
        %631 = vmatpush1.msra.mxu0 0.0
        %632 = vmatprep.subr.mxu0 0.0
        %633 = vmatpush1.msra.mxu0 0.0
        %634 = vmatprep.subr.mxu0 0.0
        %635 = vmatpush1.msra.mxu0 0.0
        %636 = vmatprep.subr.mxu0 0.0
        %637 = vmatpush1.msra.mxu0 0.0
        %638 = vmatprep.subr.mxu0 0.0
        %639 = vmatpush1.msra.mxu0 0.0
        %640 = vmatprep.subr.mxu0 0.0
        %641 = vmatpush1.msra.mxu0 0.0
        %642 = vmatprep.subr.mxu0 0.0
        %643 = vmatpush1.msra.mxu0 0.0
        %644 = vmatprep.subr.mxu0 0.0
        %645 = vmatpush1.msra.mxu0 0.0
        %646 = vmatprep.subr.mxu0 0.0
        %647 = vmatpush1.msra.mxu0 0.0
        %648 = vmatprep.subr.mxu0 0.0
        %649 = vmatpush1.msra.mxu0 0.0
        %650 = vmatprep.subr.mxu0 0.0
        %651 = vmatpush1.msra.mxu0 0.0
        %652 = vmatprep.subr.mxu0 0.0
        %653 = vmatpush1.msra.mxu0 0.0
        %654 = vmatprep.subr.mxu0 0.0
        %655 = vmatpush1.msra.mxu0 0.0
        %656 = vmatprep.subr.mxu0 0.0
        %657 = vmatpush1.msra.mxu0 0.0
        %658 = vmatprep.subr.mxu0 0.0
        %659 = vmatpush1.msra.mxu0 0.0
        %660 = vmatprep.subr.mxu0 0.0
        %661 = vmatpush1.msra.mxu0 0.0
        %662 = vmatprep.subr.mxu0 0.0
        %663 = vmatpush1.msra.mxu0 0.0
        %664 = vmatprep.subr.mxu0 0.0
        %665 = vmatpush1.msra.mxu0 0.0
        %666 = vmatprep.subr.mxu0 0.0
        %667 = vmatpush1.msra.mxu0 0.0
        %668 = vmatprep.mubr.f32.mxu0 0.0
        %669 = vmatmul.mubr.f32.gmra.mrb[0].mxu0 %v599
        %v670 = vpop.f32.mrb[0].mxu0
        %v671 = vadd.f32 %v595, %v670
        %v672 = vpop.f32.mrb[0].mxu0
        %673 = vmatprep.mubr.f32.mxu0 0.0
        %674 = vmatmul.mubr.f32.gmra.mrb[0].mxu0 %v602
        %v675 = vpop.f32.mrb[0].mxu0
        %v676 = vadd.f32 %v595, %v675
        %v677 = vpop.f32.mrb[0].mxu0
        %678 = vdwg.mxu0
        %v679 = vld [vmem:[#allocation10] sm:$0xff]
        %v680 = vld [vmem:[#allocation10 + $0x8] sm:$0xff]
        %v681 = vld [vmem:[#allocation10 + $0x10] sm:$0xff]
        %v682 = vld [vmem:[#allocation10 + $0x18] sm:$0xff]
        %v683 = vld [vmem:[%s6] sm:$0x1]
        %v685 = vlaneseq
        %v686 = vshrl.u32 %v685, 7
        %v687 = vsub.s32 0, %v686
        %v688 = vrot.slane %v683, %v687
        %v691 = vsel %vm597, %v582, 0
        %v694 = vsel %vm597, %v583, 0
        %696 = vmatprep.subr.mxu0 0.0
        %697 = vmatpush1.msra.mxu0 %v679
        %698 = vmatprep.subr.mxu0 0.0
        %699 = vmatpush1.msra.mxu0 %v680
        %700 = vmatprep.subr.mxu0 0.0
        %701 = vmatpush1.msra.mxu0 %v681
        %702 = vmatprep.subr.mxu0 0.0
        %703 = vmatpush1.msra.mxu0 %v682
        %704 = vmatprep.subr.mxu0 0.0
        %705 = vmatpush1.msra.mxu0 0.0
        %706 = vmatprep.subr.mxu0 0.0
        %707 = vmatpush1.msra.mxu0 0.0
        %708 = vmatprep.subr.mxu0 0.0
        %709 = vmatpush1.msra.mxu0 0.0
        %710 = vmatprep.subr.mxu0 0.0
        %711 = vmatpush1.msra.mxu0 0.0
        %712 = vmatprep.subr.mxu0 0.0
        %713 = vmatpush1.msra.mxu0 0.0
        %714 = vmatprep.subr.mxu0 0.0
        %715 = vmatpush1.msra.mxu0 0.0
        %716 = vmatprep.subr.mxu0 0.0
        %717 = vmatpush1.msra.mxu0 0.0
        %718 = vmatprep.subr.mxu0 0.0
        %719 = vmatpush1.msra.mxu0 0.0
        %720 = vmatprep.subr.mxu0 0.0
        %721 = vmatpush1.msra.mxu0 0.0
        %722 = vmatprep.subr.mxu0 0.0
        %723 = vmatpush1.msra.mxu0 0.0
        %724 = vmatprep.subr.mxu0 0.0
        %725 = vmatpush1.msra.mxu0 0.0
        %726 = vmatprep.subr.mxu0 0.0
        %727 = vmatpush1.msra.mxu0 0.0
        %728 = vmatprep.subr.mxu0 0.0
        %729 = vmatpush1.msra.mxu0 0.0
        %730 = vmatprep.subr.mxu0 0.0
        %731 = vmatpush1.msra.mxu0 0.0
        %732 = vmatprep.subr.mxu0 0.0
        %733 = vmatpush1.msra.mxu0 0.0
        %734 = vmatprep.subr.mxu0 0.0
        %735 = vmatpush1.msra.mxu0 0.0
        %736 = vmatprep.subr.mxu0 0.0
        %737 = vmatpush1.msra.mxu0 0.0
        %738 = vmatprep.subr.mxu0 0.0
        %739 = vmatpush1.msra.mxu0 0.0
        %740 = vmatprep.subr.mxu0 0.0
        %741 = vmatpush1.msra.mxu0 0.0
        %742 = vmatprep.subr.mxu0 0.0
        %743 = vmatpush1.msra.mxu0 0.0
        %744 = vmatprep.subr.mxu0 0.0
        %745 = vmatpush1.msra.mxu0 0.0
        %746 = vmatprep.subr.mxu0 0.0
        %747 = vmatpush1.msra.mxu0 0.0
        %748 = vmatprep.subr.mxu0 0.0
        %749 = vmatpush1.msra.mxu0 0.0
        %750 = vmatprep.subr.mxu0 0.0
        %751 = vmatpush1.msra.mxu0 0.0
        %752 = vmatprep.subr.mxu0 0.0
        %753 = vmatpush1.msra.mxu0 0.0
        %754 = vmatprep.subr.mxu0 0.0
        %755 = vmatpush1.msra.mxu0 0.0
        %756 = vmatprep.subr.mxu0 0.0
        %757 = vmatpush1.msra.mxu0 0.0
        %758 = vmatprep.subr.mxu0 0.0
        %759 = vmatpush1.msra.mxu0 0.0
        %760 = vmatprep.mubr.f32.mxu0 0.0
        %761 = vmatmul.mubr.f32.gmra.mrb[0].mxu0 %v691
        %v762 = vpop.f32.mrb[0].mxu0
        %v763 = vadd.f32 %v688, %v762
        %v764 = vpop.f32.mrb[0].mxu0
        %765 = vmatprep.mubr.f32.mxu0 0.0
        %766 = vmatmul.mubr.f32.gmra.mrb[0].mxu0 %v694
        %v767 = vpop.f32.mrb[0].mxu0
        %v768 = vadd.f32 %v688, %v767
        %v769 = vpop.f32.mrb[0].mxu0
        %770 = vdwg.mxu0
        %v771 = vld [vmem:[#allocation11] sm:$0xff]
        %v772 = vld [vmem:[#allocation11 + $0x8] sm:$0xff]
        %v773 = vld [vmem:[#allocation11 + $0x10] sm:$0xff]
        %v774 = vld [vmem:[#allocation11 + $0x18] sm:$0xff]
        %v775 = vld [vmem:[%s8] sm:$0x1]
        %v777 = vlaneseq
        %v778 = vshrl.u32 %v777, 7
        %v779 = vsub.s32 0, %v778
        %v780 = vrot.slane %v775, %v779
        %v783 = vsel %vm597, %v584, 0
        %v786 = vsel %vm597, %v585, 0
        %788 = vmatprep.subr.mxu0 0.0
        %789 = vmatpush1.msra.mxu0 %v771
        %790 = vmatprep.subr.mxu0 0.0
        %791 = vmatpush1.msra.mxu0 %v772
        %792 = vmatprep.subr.mxu0 0.0
        %793 = vmatpush1.msra.mxu0 %v773
        %794 = vmatprep.subr.mxu0 0.0
        %795 = vmatpush1.msra.mxu0 %v774
        %796 = vmatprep.subr.mxu0 0.0
        %797 = vmatpush1.msra.mxu0 0.0
        %798 = vmatprep.subr.mxu0 0.0
        %799 = vmatpush1.msra.mxu0 0.0
        %800 = vmatprep.subr.mxu0 0.0
        %801 = vmatpush1.msra.mxu0 0.0
        %802 = vmatprep.subr.mxu0 0.0
        %803 = vmatpush1.msra.mxu0 0.0
        %804 = vmatprep.subr.mxu0 0.0
        %805 = vmatpush1.msra.mxu0 0.0
        %806 = vmatprep.subr.mxu0 0.0
        %807 = vmatpush1.msra.mxu0 0.0
        %808 = vmatprep.subr.mxu0 0.0
        %809 = vmatpush1.msra.mxu0 0.0
        %810 = vmatprep.subr.mxu0 0.0
        %811 = vmatpush1.msra.mxu0 0.0
        %812 = vmatprep.subr.mxu0 0.0
        %813 = vmatpush1.msra.mxu0 0.0
        %814 = vmatprep.subr.mxu0 0.0
        %815 = vmatpush1.msra.mxu0 0.0
        %816 = vmatprep.subr.mxu0 0.0
        %817 = vmatpush1.msra.mxu0 0.0
        %818 = vmatprep.subr.mxu0 0.0
        %819 = vmatpush1.msra.mxu0 0.0
        %820 = vmatprep.subr.mxu0 0.0
        %821 = vmatpush1.msra.mxu0 0.0
        %822 = vmatprep.subr.mxu0 0.0
        %823 = vmatpush1.msra.mxu0 0.0
        %824 = vmatprep.subr.mxu0 0.0
        %825 = vmatpush1.msra.mxu0 0.0
        %826 = vmatprep.subr.mxu0 0.0
        %827 = vmatpush1.msra.mxu0 0.0
        %828 = vmatprep.subr.mxu0 0.0
        %829 = vmatpush1.msra.mxu0 0.0
        %830 = vmatprep.subr.mxu0 0.0
        %831 = vmatpush1.msra.mxu0 0.0
        %832 = vmatprep.subr.mxu0 0.0
        %833 = vmatpush1.msra.mxu0 0.0
        %834 = vmatprep.subr.mxu0 0.0
        %835 = vmatpush1.msra.mxu0 0.0
        %836 = vmatprep.subr.mxu0 0.0
        %837 = vmatpush1.msra.mxu0 0.0
        %838 = vmatprep.subr.mxu0 0.0
        %839 = vmatpush1.msra.mxu0 0.0
        %840 = vmatprep.subr.mxu0 0.0
        %841 = vmatpush1.msra.mxu0 0.0
        %842 = vmatprep.subr.mxu0 0.0
        %843 = vmatpush1.msra.mxu0 0.0
        %844 = vmatprep.subr.mxu0 0.0
        %845 = vmatpush1.msra.mxu0 0.0
        %846 = vmatprep.subr.mxu0 0.0
        %847 = vmatpush1.msra.mxu0 0.0
        %848 = vmatprep.subr.mxu0 0.0
        %849 = vmatpush1.msra.mxu0 0.0
        %850 = vmatprep.subr.mxu0 0.0
        %851 = vmatpush1.msra.mxu0 0.0
        %852 = vmatprep.mubr.f32.mxu0 0.0
        %853 = vmatmul.mubr.f32.gmra.mrb[0].mxu0 %v783
        %v854 = vpop.f32.mrb[0].mxu0
        %v855 = vadd.f32 %v780, %v854
        %v856 = vpop.f32.mrb[0].mxu0
        %857 = vmatprep.mubr.f32.mxu0 0.0
        %858 = vmatmul.mubr.f32.gmra.mrb[0].mxu0 %v786
        %v859 = vpop.f32.mrb[0].mxu0
        %v860 = vadd.f32 %v780, %v859
        %v861 = vpop.f32.mrb[0].mxu0
        %862 = vdwg.mxu0
        %v863 = vmul.f32 %v671, 0.25
        %v864 = vmul.f32 %v676, 0.25
        %865 = vst [vmem:[%s559] sm:$0xff] %v863
        %866 = vst [vmem:[%s559 + $0x8] sm:$0xff] %v864
        %867 = vst [vmem:[%s566] sm:$0xff] %v763
        %868 = vst [vmem:[%s566 + $0x8] sm:$0xff] %v768
        %869 = vst [vmem:[%s573] sm:$0xff] %v855
        %870 = vst [vmem:[%s573 + $0x8] sm:$0xff] %v860
        %s871 = sand.u32 %s269, 1
        %s872 = scalar_lea.sflag [#allocation4], %s871
        %s873 = sand.u32 %s269, 1
        %s874 = smul.addr %s873, 16
        %s875 = scalar_lea.vmem [#allocation13], %s874
        %s876 = sand.u32 %s37, 1
        %s877 = scalar_lea.sflag [#allocation15], %s876
        %s878 = sand.u32 %s297, 1
        %s879 = smul.addr %s878, 16
        %s880 = scalar_lea.vmem [#allocation14], %s879
        %s881 = sand.u32 %s37, 1
        %s882 = scalar_lea.sflag [#allocation15], %s881
        %s883 = sand.u32 %s325, 1
        %s884 = smul.addr %s883, 16
        %s885 = scalar_lea.vmem [#allocation16], %s884
        // Predicated region
        $region81: #{tpu_custom_call.1} parent=55 // pred_check
          %p886 = pneg %p279
        $region82: #{tpu_custom_call.1} parent=55 // pred_check_branch
          %888 = sbr.rel (%p886) target = $region84
        $region83: #{tpu_custom_call.1} parent=55 // pred_region
          %s889 = smul.u32 2, %s42
          %s891 = ssub.s32 256, 256
          %892 = vsyncadd %s872, %s891
          %s893 = smul.addr %s41, 2
          %s894 = sadd.s32 %s889, %s893
          %s895 = smul.addr %s894, 128
          %s896 = scalar_lea.hbm %s9, %s895
          %s897 = sshll.u32 %s875, 4
          %s898 = int_to_ptr.vmem [resolvable:$true] %s897
          %903 = dma.vmem_to_hbm [thread:$0]  %s898, 256, %s896, %s872, 128, 128, 8
        $region84: #{tpu_custom_call.1} parent=55 // pred_fallthru
          _
        // Predicated region
        $region85: #{tpu_custom_call.1} parent=55 // pred_check
          %p904 = pneg %p307
        $region86: #{tpu_custom_call.1} parent=55 // pred_check_branch
          %906 = sbr.rel (%p904) target = $region88
        $region87: #{tpu_custom_call.1} parent=55 // pred_region
          %s907 = smul.u32 2, %s42
          %s909 = ssub.s32 256, 256
          %910 = vsyncadd %s877, %s909
          %s911 = smul.addr %s41, 2
          %s912 = sadd.s32 %s907, %s911
          %s913 = smul.addr %s912, 128
          %s914 = scalar_lea.hbm %s10, %s913
          %s915 = sshll.u32 %s880, 4
          %s916 = int_to_ptr.vmem [resolvable:$true] %s915
          %921 = dma.vmem_to_hbm [thread:$0]  %s916, 256, %s914, %s877, 128, 128, 8
        $region88: #{tpu_custom_call.1} parent=55 // pred_fallthru
          _
        // Predicated region
        $region89: #{tpu_custom_call.1} parent=55 // pred_check
          %p922 = pneg %p335
        $region90: #{tpu_custom_call.1} parent=55 // pred_check_branch
          %924 = sbr.rel (%p922) target = $region92
        $region91: #{tpu_custom_call.1} parent=55 // pred_region
          %s925 = smul.u32 2, %s42
          %s927 = ssub.s32 256, 256
          %928 = vsyncadd %s882, %s927
          %s929 = smul.addr %s41, 2
          %s930 = sadd.s32 %s925, %s929
          %s931 = smul.addr %s930, 128
          %s932 = scalar_lea.hbm %s11, %s931
          %s933 = sshll.u32 %s885, 4
          %s934 = int_to_ptr.vmem [resolvable:$true] %s933
          %939 = dma.vmem_to_hbm [thread:$0]  %s934, 256, %s932, %s882, 128, 128, 8
        $region92: #{tpu_custom_call.1} parent=55 // pred_fallthru
          _
      $region56: #{tpu_custom_call.1} parent=5 // pred_fallthru
        _
      %p940 = scmp.le.s32.totalorder 2, %s32
      // Predicated region
      $region93: #{tpu_custom_call.1} parent=5 // pred_check
        %p941 = pneg %p940
      $region94: #{tpu_custom_call.1} parent=5 // pred_check_branch
        %943 = sbr.rel (%p941) target = $region96
      $region95: #{tpu_custom_call.1} parent=5 // pred_region
        %s944 = ssub.s32 %s32, 2
        // Predicated region
        $region97: #{tpu_custom_call.1} parent=95 // pred_check
          %p945 = pneg %p285
        $region98: #{tpu_custom_call.1} parent=95 // pred_check_branch
          %947 = sbr.rel (%p945) target = $region100
        $region99: #{tpu_custom_call.1} parent=95 // pred_region
          %s948 = sand.u32 %s270, 1
          %s949 = scalar_lea.sflag [#allocation4], %s948
          %s950 = sand.u32 %s270, 1
          %s951 = smul.addr %s950, 16
          %s952 = scalar_lea.vmem [#allocation13], %s951
          %953 = dma.done %s949, 256
        $region100: #{tpu_custom_call.1} parent=95 // pred_fallthru
          _
        // Predicated region
        $region101: #{tpu_custom_call.1} parent=95 // pred_check
          %p954 = pneg %p313
        $region102: #{tpu_custom_call.1} parent=95 // pred_check_branch
          %956 = sbr.rel (%p954) target = $region104
        $region103: #{tpu_custom_call.1} parent=95 // pred_region
          %s957 = sand.u32 %s38, 1
          %s958 = scalar_lea.sflag [#allocation15], %s957
          %s959 = sand.u32 %s298, 1
          %s960 = smul.addr %s959, 16
          %s961 = scalar_lea.vmem [#allocation14], %s960
          %962 = dma.done %s958, 256
        $region104: #{tpu_custom_call.1} parent=95 // pred_fallthru
          _
        // Predicated region
        $region105: #{tpu_custom_call.1} parent=95 // pred_check
          %p963 = pneg %p341
        $region106: #{tpu_custom_call.1} parent=95 // pred_check_branch
          %965 = sbr.rel (%p963) target = $region108
        $region107: #{tpu_custom_call.1} parent=95 // pred_region
          %s966 = sand.u32 %s38, 1
          %s967 = scalar_lea.sflag [#allocation15], %s966
          %s968 = sand.u32 %s326, 1
          %s969 = smul.addr %s968, 16
          %s970 = scalar_lea.vmem [#allocation16], %s969
          %971 = dma.done %s967, 256
        $region108: #{tpu_custom_call.1} parent=95 // pred_fallthru
          _
      $region96: #{tpu_custom_call.1} parent=5 // pred_fallthru
        _
    $region6: #{tpu_custom_call.1} parent=1 // loop_footer
      %s36 = sadd.s32 1, %s32
    $region7: #{tpu_custom_call.1} parent=1 // loop_footer_branch
      %31 = sbr.rel target = $region3
    $region8: #{tpu_custom_call.1} parent=1 // loop_exit
      _
    %972 = vsyncpa [#allocation3], 1
    %s973 = scalar_lea.sflag [#allocation3], 1
    %974 = vsyncpa %s973, 1
    %975 = vsyncpa [#allocation6], 1
    %s976 = scalar_lea.sflag [#allocation6], 1
    %977 = vsyncpa %s976, 1
    %978 = vsyncpa [#allocation9], 1
    %979 = vsyncpa [#allocation12], 1
    %980 = vsyncpa [#allocation4], 1
    %s981 = scalar_lea.sflag [#allocation4], 1
    %982 = vsyncpa %s981, 1
    %983 = vsyncpa [#allocation15], 1
    %s984 = scalar_lea.sflag [#allocation15], 1
    %985 = vsyncpa %s984, 1

</llo_original>
